<compile_context>
chip_gen: v5e
topology: v5e:2x2
jax: 0.10.0
libtpu: 0.0.40
codegen_flags: <defaults>
</compile_context>

<pallas_src>
import functools

import jax
import jax.numpy as jnp
from jax.experimental import pallas as pl
from jax.experimental.pallas import tpu as pltpu

OBS = 3
ACT = 3
HIDDEN = 256


def _critic_kernel(x_ref, a_ref, w1x_ref, w1a_ref, b1_ref,
                   w2_ref, b2_ref, w3_ref, b3_ref,
                   w4_ref, b4_ref, q_ref):
    # x_ref / a_ref: (TM, 3) f32 activation tiles streamed over the batch grid.
    # Weight refs are bf16 (matmul inputs) and VMEM-resident (constant block).
    x = x_ref[...].astype(jnp.bfloat16)
    a = a_ref[...].astype(jnp.bfloat16)

    # fc1 on [x; a] without materializing the concat: split-K matmul.
    h = jnp.dot(x, w1x_ref[...], preferred_element_type=jnp.float32)
    h = h + jnp.dot(a, w1a_ref[...], preferred_element_type=jnp.float32)
    h = jnp.maximum(h + b1_ref[...], 0.0)                      # (TM, 256) f32

    h = jnp.dot(h.astype(jnp.bfloat16), w2_ref[...],
                preferred_element_type=jnp.float32)
    h = jnp.maximum(h + b2_ref[...], 0.0)                      # (TM, 256) f32

    h = jnp.dot(h.astype(jnp.bfloat16), w3_ref[...],
                preferred_element_type=jnp.float32)
    h = jnp.maximum(h + b3_ref[...], 0.0)                      # (TM, 256) f32

    # Output head 256 -> 1: VPU multiply + lane reduction (keeps the single
    # column result off the MXU critical path).
    q = jnp.sum(h * w4_ref[...], axis=-1, keepdims=True) + b4_ref[...]
    q_ref[...] = q                                             # (TM, 1) f32


def _round_up(n, m):
    return ((n + m - 1) // m) * m


@functools.partial(jax.jit, static_argnames=("tile_m",))
def critic_forward(x, actions, params, *, tile_m=256):
    """x: (B, 3) f32, actions: (B, 3) f32 -> q: (B, 1) f32."""
    w1, b1, w2, b2, w3, b3, w4, b4 = params
    B = x.shape[0]

    # Batch tile: multiples of 256 feed full MXU height; tiny batches just
    # round up to the f32 sublane (8) and use a single grid step.
    tm = tile_m if B >= tile_m else _round_up(max(B, 1), 8)
    Bp = _round_up(B, tm)
    if Bp != B:
        pad = ((0, Bp - B), (0, 0))
        x = jnp.pad(x, pad)
        actions = jnp.pad(actions, pad)

    # bf16 weights for the MXU; biases and the 256->1 head stay f32 (VPU path).
    w1x = w1[:OBS].astype(jnp.bfloat16)                 # (3, 256)
    w1a = w1[OBS:].astype(jnp.bfloat16)                 # (3, 256)
    b1f = b1.reshape(1, HIDDEN).astype(jnp.float32)
    w2b = w2.astype(jnp.bfloat16)                       # (256, 256)
    b2f = b2.reshape(1, HIDDEN).astype(jnp.float32)
    w3b = w3.astype(jnp.bfloat16)                       # (256, 256)
    b3f = b3.reshape(1, HIDDEN).astype(jnp.float32)
    w4row = w4.reshape(1, HIDDEN).astype(jnp.float32)   # (1, 256)
    b4s = b4.reshape(1, 1).astype(jnp.float32)          # (1, 1)

    grid = (Bp // tm,)

    def stream(shape):          # activation tiles: stream over the batch grid
        return pl.BlockSpec(shape, lambda i: (i, 0))

    def resident(arr):          # weights / biases: constant block -> VMEM-resident
        return pl.BlockSpec(arr.shape, lambda i: (0,) * arr.ndim)

    q = pl.pallas_call(
        _critic_kernel,
        out_shape=jax.ShapeDtypeStruct((Bp, 1), jnp.float32),
        grid=grid,
        in_specs=[
            stream((tm, OBS)),            # x tile
            stream((tm, ACT)),            # actions tile
            resident(w1x), resident(w1a), resident(b1f),
            resident(w2b), resident(b2f),
            resident(w3b), resident(b3f),
            resident(w4row), resident(b4s),
        ],
        out_specs=stream((tm, 1)),
        compiler_params=pltpu.CompilerParams(
            dimension_semantics=("parallel",),   # megacore split on v7x
        ),
    )(x, actions, w1x, w1a, b1f, w2b, b2f, w3b, b3f, w4row, b4s)

    return q[:B]


def critic_reference(x, actions, params):
    """Plain-JAX reference mirroring the kernel's bf16-weight / f32-accum choices."""
    w1, b1, w2, b2, w3, b3, w4, b4 = params
    xa = jnp.concatenate([x, actions], axis=1).astype(jnp.bfloat16)
    h = jnp.maximum(jnp.dot(xa, w1.astype(jnp.bfloat16),
                            preferred_element_type=jnp.float32)
                    + b1.reshape(1, HIDDEN), 0.0)
    h = jnp.maximum(jnp.dot(h.astype(jnp.bfloat16), w2.astype(jnp.bfloat16),
                            preferred_element_type=jnp.float32)
                    + b2.reshape(1, HIDDEN), 0.0)
    h = jnp.maximum(jnp.dot(h.astype(jnp.bfloat16), w3.astype(jnp.bfloat16),
                            preferred_element_type=jnp.float32)
                    + b3.reshape(1, HIDDEN), 0.0)
    q = jnp.sum(h * w4.reshape(1, HIDDEN), axis=-1, keepdims=True)
    return q + b4.reshape(1, 1)


def init_params(key):
    """Deterministic init matching nn.Linear shapes (stored as (in, out)), f32 master."""
    dims = [(OBS + ACT, HIDDEN), (HIDDEN, HIDDEN), (HIDDEN, HIDDEN), (HIDDEN, 1)]
    params = []
    for i, (fan_in, fan_out) in enumerate(dims):
        kw, kb = jax.random.split(jax.random.fold_in(key, i))
        bound = 1.0 / jnp.sqrt(fan_in)
        w = jax.random.uniform(kw, (fan_in, fan_out), jnp.float32, -bound, bound)
        b = jax.random.uniform(kb, (1, fan_out), jnp.float32, -bound, bound)
        params += [w, b]
    return tuple(params)


if __name__ == "__main__":
    key = jax.random.PRNGKey(0)
    k_x, k_a, k_p = jax.random.split(key, 3)

    B = 8
    x = jax.random.normal(k_x, (B, OBS), jnp.float32)
    actions = jax.random.normal(k_a, (B, ACT), jnp.float32)
    params = init_params(k_p)

    q = critic_forward(x, actions, params)
    jax.block_until_ready(q)
    assert q.shape == (B, 1)
    q_ref = critic_reference(x, actions, params)
    assert jnp.allclose(q, q_ref, atol=2e-3, rtol=2e-3), \
        float(jnp.max(jnp.abs(q - q_ref)))

    # Exercise the batch-padding path (non-multiple-of-8 batch).
    B2 = 5
    x2 = jax.random.normal(jax.random.fold_in(key, 7), (B2, OBS), jnp.float32)
    a2 = jax.random.normal(jax.random.fold_in(key, 8), (B2, ACT), jnp.float32)
    q2 = critic_forward(x2, a2, params)
    jax.block_until_ready(q2)
    assert q2.shape == (B2, 1)
    assert jnp.allclose(q2, critic_reference(x2, a2, params), atol=2e-3, rtol=2e-3)

    # TODO(synk): save_model (torch.save state-dict I/O) has no kernel equivalent.
    print("KERNEL_OK")
</pallas_src>

<mosaic_0001>
module attributes {stable_mosaic.version = 11 : i64} {
  func.func @_critic_kernel(%arg0: i32, %arg1: memref<8x3xf32, #tpu.memory_space<vmem>>, %arg2: memref<8x3xf32, #tpu.memory_space<vmem>>, %arg3: memref<3x256xbf16, #tpu.memory_space<vmem>>, %arg4: memref<3x256xbf16, #tpu.memory_space<vmem>>, %arg5: memref<1x256xf32, #tpu.memory_space<vmem>>, %arg6: memref<256x256xbf16, #tpu.memory_space<vmem>>, %arg7: memref<1x256xf32, #tpu.memory_space<vmem>>, %arg8: memref<256x256xbf16, #tpu.memory_space<vmem>>, %arg9: memref<1x256xf32, #tpu.memory_space<vmem>>, %arg10: memref<1x256xf32, #tpu.memory_space<vmem>>, %arg11: memref<1x1xf32, #tpu.memory_space<vmem>>, %arg12: memref<8x1xf32, #tpu.memory_space<vmem>>) attributes {dimension_semantics = [#tpu.dimension_semantics<parallel>], iteration_bounds = array<i64: 1>, scalar_prefetch = 0 : i64, scratch_operands = 0 : i64, tpu.core_type = #tpu.core_type<tc>, window_params = [{transform_indices = @transform_0, window_bounds = array<i64: 8, 3>}, {transform_indices = @transform_1, window_bounds = array<i64: 8, 3>}, {pipeline_mode = #tpu.pipeline_mode<synchronous>, transform_indices = @transform_2, window_bounds = array<i64: 3, 256>}, {pipeline_mode = #tpu.pipeline_mode<synchronous>, transform_indices = @transform_3, window_bounds = array<i64: 3, 256>}, {pipeline_mode = #tpu.pipeline_mode<synchronous>, transform_indices = @transform_4, window_bounds = array<i64: 1, 256>}, {pipeline_mode = #tpu.pipeline_mode<synchronous>, transform_indices = @transform_5, window_bounds = array<i64: 256, 256>}, {pipeline_mode = #tpu.pipeline_mode<synchronous>, transform_indices = @transform_6, window_bounds = array<i64: 1, 256>}, {pipeline_mode = #tpu.pipeline_mode<synchronous>, transform_indices = @transform_7, window_bounds = array<i64: 256, 256>}, {pipeline_mode = #tpu.pipeline_mode<synchronous>, transform_indices = @transform_8, window_bounds = array<i64: 1, 256>}, {pipeline_mode = #tpu.pipeline_mode<synchronous>, transform_indices = @transform_9, window_bounds = array<i64: 1, 256>}, {pipeline_mode = #tpu.pipeline_mode<synchronous>, transform_indices = @transform_10, window_bounds = array<i64: 1, 1>}, {transform_indices = @transform_11, window_bounds = array<i64: 8, 1>}]} {
    %c0 = arith.constant 0 : index
    %c0_0 = arith.constant 0 : index
    %0 = vector.load %arg1[%c0, %c0_0] : memref<8x3xf32, #tpu.memory_space<vmem>>, vector<8x3xf32>
    %1 = arith.truncf %0 : vector<8x3xf32> to vector<8x3xbf16>
    %c0_1 = arith.constant 0 : index
    %c0_2 = arith.constant 0 : index
    %2 = vector.load %arg2[%c0_1, %c0_2] : memref<8x3xf32, #tpu.memory_space<vmem>>, vector<8x3xf32>
    %3 = arith.truncf %2 : vector<8x3xf32> to vector<8x3xbf16>
    %c0_3 = arith.constant 0 : index
    %c0_4 = arith.constant 0 : index
    %4 = vector.load %arg3[%c0_3, %c0_4] : memref<3x256xbf16, #tpu.memory_space<vmem>>, vector<3x256xbf16>
    %cst = arith.constant dense<0.000000e+00> : vector<8x256xf32>
    %5 = tpu.matmul %1, %4, %cst {dimension_numbers = #tpu.dot_dimension_numbers<[1], [0], [0], [1], [0, 0, 1, 1], [], []>} : vector<8x3xbf16>, vector<3x256xbf16>, vector<8x256xf32> -> vector<8x256xf32>
    %c0_5 = arith.constant 0 : index
    %c0_6 = arith.constant 0 : index
    %6 = vector.load %arg4[%c0_5, %c0_6] : memref<3x256xbf16, #tpu.memory_space<vmem>>, vector<3x256xbf16>
    %cst_7 = arith.constant dense<0.000000e+00> : vector<8x256xf32>
    %7 = tpu.matmul %3, %6, %cst_7 {dimension_numbers = #tpu.dot_dimension_numbers<[1], [0], [0], [1], [0, 0, 1, 1], [], []>} : vector<8x3xbf16>, vector<3x256xbf16>, vector<8x256xf32> -> vector<8x256xf32>
    %8 = arith.addf %5, %7 : vector<8x256xf32>
    %c0_8 = arith.constant 0 : index
    %c0_9 = arith.constant 0 : index
    %9 = vector.load %arg5[%c0_8, %c0_9] : memref<1x256xf32, #tpu.memory_space<vmem>>, vector<1x256xf32>
    %10 = vector.broadcast %9 : vector<1x256xf32> to vector<8x256xf32>
    %11 = arith.addf %8, %10 : vector<8x256xf32>
    %cst_10 = arith.constant 0.000000e+00 : f32
    %12 = vector.broadcast %cst_10 : f32 to vector<8x256xf32>
    %13 = arith.maximumf %11, %12 : vector<8x256xf32>
    %14 = arith.truncf %13 : vector<8x256xf32> to vector<8x256xbf16>
    %c0_11 = arith.constant 0 : index
    %c0_12 = arith.constant 0 : index
    %15 = vector.load %arg6[%c0_11, %c0_12] : memref<256x256xbf16, #tpu.memory_space<vmem>>, vector<256x256xbf16>
    %cst_13 = arith.constant dense<0.000000e+00> : vector<8x256xf32>
    %16 = tpu.matmul %14, %15, %cst_13 {dimension_numbers = #tpu.dot_dimension_numbers<[1], [0], [0], [1], [0, 0, 1, 1], [], []>} : vector<8x256xbf16>, vector<256x256xbf16>, vector<8x256xf32> -> vector<8x256xf32>
    %c0_14 = arith.constant 0 : index
    %c0_15 = arith.constant 0 : index
    %17 = vector.load %arg7[%c0_14, %c0_15] : memref<1x256xf32, #tpu.memory_space<vmem>>, vector<1x256xf32>
    %18 = vector.broadcast %17 : vector<1x256xf32> to vector<8x256xf32>
    %19 = arith.addf %16, %18 : vector<8x256xf32>
    %cst_16 = arith.constant 0.000000e+00 : f32
    %20 = vector.broadcast %cst_16 : f32 to vector<8x256xf32>
    %21 = arith.maximumf %19, %20 : vector<8x256xf32>
    %22 = arith.truncf %21 : vector<8x256xf32> to vector<8x256xbf16>
    %c0_17 = arith.constant 0 : index
    %c0_18 = arith.constant 0 : index
    %23 = vector.load %arg8[%c0_17, %c0_18] : memref<256x256xbf16, #tpu.memory_space<vmem>>, vector<256x256xbf16>
    %cst_19 = arith.constant dense<0.000000e+00> : vector<8x256xf32>
    %24 = tpu.matmul %22, %23, %cst_19 {dimension_numbers = #tpu.dot_dimension_numbers<[1], [0], [0], [1], [0, 0, 1, 1], [], []>} : vector<8x256xbf16>, vector<256x256xbf16>, vector<8x256xf32> -> vector<8x256xf32>
    %c0_20 = arith.constant 0 : index
    %c0_21 = arith.constant 0 : index
    %25 = vector.load %arg9[%c0_20, %c0_21] : memref<1x256xf32, #tpu.memory_space<vmem>>, vector<1x256xf32>
    %26 = vector.broadcast %25 : vector<1x256xf32> to vector<8x256xf32>
    %27 = arith.addf %24, %26 : vector<8x256xf32>
    %cst_22 = arith.constant 0.000000e+00 : f32
    %28 = vector.broadcast %cst_22 : f32 to vector<8x256xf32>
    %29 = arith.maximumf %27, %28 : vector<8x256xf32>
    %c0_23 = arith.constant 0 : index
    %c0_24 = arith.constant 0 : index
    %30 = vector.load %arg10[%c0_23, %c0_24] : memref<1x256xf32, #tpu.memory_space<vmem>>, vector<1x256xf32>
    %31 = vector.broadcast %30 : vector<1x256xf32> to vector<8x256xf32>
    %32 = arith.mulf %29, %31 : vector<8x256xf32>
    %cst_25 = arith.constant dense<0.000000e+00> : vector<8xf32>
    %33 = vector.multi_reduction <add>, %32, %cst_25 [1] : vector<8x256xf32> to vector<8xf32>
    %34 = vector.shape_cast %33 : vector<8xf32> to vector<8x1xf32>
    %c0_26 = arith.constant 0 : index
    %c0_27 = arith.constant 0 : index
    %35 = vector.load %arg11[%c0_26, %c0_27] : memref<1x1xf32, #tpu.memory_space<vmem>>, vector<1x1xf32>
    %36 = vector.broadcast %35 : vector<1x1xf32> to vector<8x1xf32>
    %37 = arith.addf %34, %36 : vector<8x1xf32>
    %c0_28 = arith.constant 0 : index
    %c0_29 = arith.constant 0 : index
    %38 = vector.load %arg12[%c0_28, %c0_29] : memref<8x1xf32, #tpu.memory_space<vmem>>, vector<8x1xf32>
    tpu.vector_store %arg12[%c0_28, %c0_29], %37 {strides = array<i32>} : memref<8x1xf32, #tpu.memory_space<vmem>>, vector<8x1xf32>,
    return
  }
  func.func @transform_0(%arg0: i32) -> (i32, i32) {
    %c0_i32 = arith.constant 0 : i32
    %c0_i32_0 = arith.constant 0 : i32
    return %arg0, %c0_i32 : i32, i32
  }
  func.func @transform_1(%arg0: i32) -> (i32, i32) {
    %c0_i32 = arith.constant 0 : i32
    %c0_i32_0 = arith.constant 0 : i32
    return %arg0, %c0_i32 : i32, i32
  }
  func.func @transform_2(%arg0: i32) -> (i32, i32) {
    %c0_i32 = arith.constant 0 : i32
    %c0_i32_0 = arith.constant 0 : i32
    %c0_i32_1 = arith.constant 0 : i32
    return %c0_i32, %c0_i32_0 : i32, i32
  }
  func.func @transform_3(%arg0: i32) -> (i32, i32) {
    %c0_i32 = arith.constant 0 : i32
    %c0_i32_0 = arith.constant 0 : i32
    %c0_i32_1 = arith.constant 0 : i32
    return %c0_i32, %c0_i32_0 : i32, i32
  }
  func.func @transform_4(%arg0: i32) -> (i32, i32) {
    %c0_i32 = arith.constant 0 : i32
    %c0_i32_0 = arith.constant 0 : i32
    %c0_i32_1 = arith.constant 0 : i32
    return %c0_i32, %c0_i32_0 : i32, i32
  }
  func.func @transform_5(%arg0: i32) -> (i32, i32) {
    %c0_i32 = arith.constant 0 : i32
    %c0_i32_0 = arith.constant 0 : i32
    %c0_i32_1 = arith.constant 0 : i32
    return %c0_i32, %c0_i32_0 : i32, i32
  }
  func.func @transform_6(%arg0: i32) -> (i32, i32) {
    %c0_i32 = arith.constant 0 : i32
    %c0_i32_0 = arith.constant 0 : i32
    %c0_i32_1 = arith.constant 0 : i32
    return %c0_i32, %c0_i32_0 : i32, i32
  }
  func.func @transform_7(%arg0: i32) -> (i32, i32) {
    %c0_i32 = arith.constant 0 : i32
    %c0_i32_0 = arith.constant 0 : i32
    %c0_i32_1 = arith.constant 0 : i32
    return %c0_i32, %c0_i32_0 : i32, i32
  }
  func.func @transform_8(%arg0: i32) -> (i32, i32) {
    %c0_i32 = arith.constant 0 : i32
    %c0_i32_0 = arith.constant 0 : i32
    %c0_i32_1 = arith.constant 0 : i32
    return %c0_i32, %c0_i32_0 : i32, i32
  }
  func.func @transform_9(%arg0: i32) -> (i32, i32) {
    %c0_i32 = arith.constant 0 : i32
    %c0_i32_0 = arith.constant 0 : i32
    %c0_i32_1 = arith.constant 0 : i32
    return %c0_i32, %c0_i32_0 : i32, i32
  }
  func.func @transform_10(%arg0: i32) -> (i32, i32) {
    %c0_i32 = arith.constant 0 : i32
    %c0_i32_0 = arith.constant 0 : i32
    %c0_i32_1 = arith.constant 0 : i32
    return %c0_i32, %c0_i32_0 : i32, i32
  }
  func.func @transform_11(%arg0: i32) -> (i32, i32) {
    %c0_i32 = arith.constant 0 : i32
    %c0_i32_0 = arith.constant 0 : i32
    return %arg0, %c0_i32 : i32, i32
  }
}

</mosaic_0001>

<llo_original>
// kernel: critic_forward.1
$region0: #{critic_forward.1}
  #allocation0 [shape = 'u32[]', space=smem, size = 0x4, offset = 0x4, fixed_abs, tag = 'smem constant byte address 0x4 - core index']
  #allocation1 [shape = 'u32[72,128]{1,0:T(1,128)}', space=vmem, size = 0x9000, scoped, tag = 'internal scratch']
  #allocation2 [shape = 'f32[1,1]{1,0:T(1,128)S(1)}', space=vmem, size = 0x200, scoped, tag = 'scoped memory for critic_forward.1']
  %s0 = inlined_call_operand.vmem [shape: f32[8,3], index: 0, kind: input, shape index: {}]
  %s1 = inlined_call_operand.vmem [shape: f32[8,3], index: 1, kind: input, shape index: {}]
  %s2 = inlined_call_operand.vmem [shape: bf16[3,256], index: 2, kind: input, shape index: {}]
  %s3 = inlined_call_operand.vmem [shape: bf16[3,256], index: 3, kind: input, shape index: {}]
  %s4 = inlined_call_operand.vmem [shape: f32[1,256], index: 4, kind: input, shape index: {}]
  %s5 = inlined_call_operand.vmem [shape: bf16[256,256], index: 5, kind: input, shape index: {}]
  %s6 = inlined_call_operand.vmem [shape: f32[1,256], index: 6, kind: input, shape index: {}]
  %s7 = inlined_call_operand.vmem [shape: bf16[256,256], index: 7, kind: input, shape index: {}]
  %s8 = inlined_call_operand.vmem [shape: f32[1,256], index: 8, kind: input, shape index: {}]
  %s9 = inlined_call_operand.vmem [shape: f32[1,256], index: 9, kind: input, shape index: {}]
  %s10 = inlined_call_operand.<no memory space> [shape: f32[1,1], index: 10, kind: input, shape index: {}]
  %s11 = inlined_call_operand.vmem [shape: f32[8,1], index: 11, kind: output, shape index: {}]
  %s12 = sld [smem:[#allocation0]]
  $region54: #{critic_forward.1} parent=0
    _
  %s14 = ssub.s32 1, %s12
  %s15 = scalar_select 0, %s14, %s12
  %v16 = vstv %s10
  %17 = vst [vmem:[#allocation2] sm:$0x1] %v16
  // Predicated region
  $region2: #{critic_forward.1} parent=0 // pred_check
    _
  $region3: #{critic_forward.1} parent=0 // pred_check_branch
    %19 = sbr.rel (0) target = $region5
  $region4: #{critic_forward.1} parent=0 // pred_region
    _
  $region5: #{critic_forward.1} parent=0 // pred_fallthru
    _
  // Predicated region
  $region6: #{critic_forward.1} parent=0 // pred_check
    _
  $region7: #{critic_forward.1} parent=0 // pred_check_branch
    %21 = sbr.rel (0) target = $region9
  $region8: #{critic_forward.1} parent=0 // pred_region
    _
  $region9: #{critic_forward.1} parent=0 // pred_fallthru
    _
  // Predicated region
  $region10: #{critic_forward.1} parent=0 // pred_check
    _
  $region11: #{critic_forward.1} parent=0 // pred_check_branch
    %23 = sbr.rel (0) target = $region13
  $region12: #{critic_forward.1} parent=0 // pred_region
    _
  $region13: #{critic_forward.1} parent=0 // pred_fallthru
    _
  // Predicated region
  $region14: #{critic_forward.1} parent=0 // pred_check
    _
  $region15: #{critic_forward.1} parent=0 // pred_check_branch
    %25 = sbr.rel (0) target = $region17
  $region16: #{critic_forward.1} parent=0 // pred_region
    _
  $region17: #{critic_forward.1} parent=0 // pred_fallthru
    _
  // Predicated region
  $region18: #{critic_forward.1} parent=0 // pred_check
    _
  $region19: #{critic_forward.1} parent=0 // pred_check_branch
    %27 = sbr.rel (0) target = $region21
  $region20: #{critic_forward.1} parent=0 // pred_region
    _
  $region21: #{critic_forward.1} parent=0 // pred_fallthru
    _
  // Predicated region
  $region22: #{critic_forward.1} parent=0 // pred_check
    _
  $region23: #{critic_forward.1} parent=0 // pred_check_branch
    %29 = sbr.rel (0) target = $region25
  $region24: #{critic_forward.1} parent=0 // pred_region
    _
  $region25: #{critic_forward.1} parent=0 // pred_fallthru
    _
  // Predicated region
  $region26: #{critic_forward.1} parent=0 // pred_check
    _
  $region27: #{critic_forward.1} parent=0 // pred_check_branch
    %31 = sbr.rel (0) target = $region29
  $region28: #{critic_forward.1} parent=0 // pred_region
    _
  $region29: #{critic_forward.1} parent=0 // pred_fallthru
    _
  // Predicated region
  $region30: #{critic_forward.1} parent=0 // pred_check
    _
  $region31: #{critic_forward.1} parent=0 // pred_check_branch
    %33 = sbr.rel (0) target = $region33
  $region32: #{critic_forward.1} parent=0 // pred_region
    _
  $region33: #{critic_forward.1} parent=0 // pred_fallthru
    _
  // Predicated region
  $region34: #{critic_forward.1} parent=0 // pred_check
    _
  $region35: #{critic_forward.1} parent=0 // pred_check_branch
    %35 = sbr.rel (0) target = $region37
  $region36: #{critic_forward.1} parent=0 // pred_region
    _
  $region37: #{critic_forward.1} parent=0 // pred_fallthru
    _
  // Predicated region
  $region38: #{critic_forward.1} parent=0 // pred_check
    _
  $region39: #{critic_forward.1} parent=0 // pred_check_branch
    %37 = sbr.rel (0) target = $region41
  $region40: #{critic_forward.1} parent=0 // pred_region
    _
  $region41: #{critic_forward.1} parent=0 // pred_fallthru
    _
  // Predicated region
  $region42: #{critic_forward.1} parent=0 // pred_check
    _
  $region43: #{critic_forward.1} parent=0 // pred_check_branch
    %39 = sbr.rel (0) target = $region45
  $region44: #{critic_forward.1} parent=0 // pred_region
    _
  $region45: #{critic_forward.1} parent=0 // pred_fallthru
    _
  %v41 = vld [vmem:[%s0] sm:$0xff]
  %v42 = vpack.c.bf16 %v41, %v41
  %v43 = vld [vmem:[%s1] sm:$0xff]
  %v44 = vpack.c.bf16 %v43, %v43
  %v45 = vld [vmem:[%s2] sm:$0xf]
  %v46 = vld [vmem:[%s3] sm:$0xf]
  %48 = vst [vmem:[#allocation1] ss:$4 sm:$0xff] %v46
  %v49 = vld.sshfl [vmem:[#allocation1] sm:$0xff pattern:$0x73625140]
  %v50 = vld.sshfl [vmem:[#allocation1 + $0x8] sm:$0xff pattern:$0x73625140]
  %vm51 = vcmask 23552
  %v53 = vsel %vm51, %v44, 0
  %vm55 = vcmask 1040384
  %vm56 = vcmask 1041408
  %v57 = vsel %vm55, 4294967295, 65535
  %v58 = vsel %vm56, %v57, 0
  %v59 = vand.u32 %v49, %v58
  %v61 = vand.u32 %v50, %v58
  %63 = vmatpush.bf16.msra.mxu0 0
  %64 = vmatpush.bf16.msra.mxu0 0
  %65 = vmatpush.bf16.msra.mxu0 0
  %66 = vmatpush.bf16.msra.mxu0 0
  %67 = vmatpush.bf16.msra.mxu0 0
  %68 = vmatpush.bf16.msra.mxu0 0
  %69 = vmatpush.bf16.msra.mxu0 0
  %70 = vmatpush.bf16.msra.mxu0 %v59
  %71 = vmatmul.bf16.gmra.mxu0 %v53
  %v72 = vpop.f32.mrf.mxu0
  %v73 = vadd.f32 0.0, %v72
  %v74 = vpop.f32.mrf.mxu0
  %75 = vdwg.mxu0
  %76 = vmatpush.bf16.msra.mxu0 0
  %77 = vmatpush.bf16.msra.mxu0 0
  %78 = vmatpush.bf16.msra.mxu0 0
  %79 = vmatpush.bf16.msra.mxu0 0
  %80 = vmatpush.bf16.msra.mxu0 0
  %81 = vmatpush.bf16.msra.mxu0 0
  %82 = vmatpush.bf16.msra.mxu0 0
  %83 = vmatpush.bf16.msra.mxu0 %v61
  %84 = vmatmul.bf16.gmra.mxu0 %v53
  %v85 = vpop.f32.mrf.mxu0
  %v86 = vadd.f32 0.0, %v85
  %v87 = vpop.f32.mrf.mxu0
  %88 = vdwg.mxu0
  %90 = vst [vmem:[#allocation1] ss:$4 sm:$0xff] %v45
  %v91 = vld.sshfl [vmem:[#allocation1] sm:$0xff pattern:$0x73625140]
  %v92 = vld.sshfl [vmem:[#allocation1 + $0x8] sm:$0xff pattern:$0x73625140]
  %v94 = vsel %vm51, %v42, 0
  %v96 = vand.u32 %v91, %v58
  %v98 = vand.u32 %v92, %v58
  %100 = vmatpush.bf16.msra.mxu0 0
  %101 = vmatpush.bf16.msra.mxu0 0
  %102 = vmatpush.bf16.msra.mxu0 0
  %103 = vmatpush.bf16.msra.mxu0 0
  %104 = vmatpush.bf16.msra.mxu0 0
  %105 = vmatpush.bf16.msra.mxu0 0
  %106 = vmatpush.bf16.msra.mxu0 0
  %107 = vmatpush.bf16.msra.mxu0 %v96
  %108 = vmatmul.bf16.gmra.mxu0 %v94
  %v109 = vpop.f32.mrf.mxu0
  %v110 = vadd.f32 %v73, %v109
  %v111 = vpop.f32.mrf.mxu0
  %112 = vdwg.mxu0
  %113 = vmatpush.bf16.msra.mxu0 0
  %114 = vmatpush.bf16.msra.mxu0 0
  %115 = vmatpush.bf16.msra.mxu0 0
  %116 = vmatpush.bf16.msra.mxu0 0
  %117 = vmatpush.bf16.msra.mxu0 0
  %118 = vmatpush.bf16.msra.mxu0 0
  %119 = vmatpush.bf16.msra.mxu0 0
  %120 = vmatpush.bf16.msra.mxu0 %v98
  %121 = vmatmul.bf16.gmra.mxu0 %v94
  %v122 = vpop.f32.mrf.mxu0
  %v123 = vadd.f32 %v86, %v122
  %v124 = vpop.f32.mrf.mxu0
  %125 = vdwg.mxu0
  %v126 = vld [vmem:[%s4] sm:$0x3]
  %v128 = vperm.slane %v126, 0
  %v129 = vperm.slane %v126, 1
  %v132 = vadd.f32 %v110, %v128
  %v133 = vadd.f32 %v123, %v129
  %v134 = vmax.f32 %v132, 0.0
  %v135 = vmax.f32 %v133, 0.0
  %v136 = vpack.c.bf16 %v134, %v134
  %v137 = vpack.c.bf16 %v135, %v135
  %v138 = vld [vmem:[%s5] sm:$0xff]
  %v139 = vld [vmem:[%s5 + $0x8] sm:$0xff]
  %v140 = vld [vmem:[%s5 + $0x10] sm:$0xff]
  %v141 = vld [vmem:[%s5 + $0x18] sm:$0xff]
  %v142 = vld [vmem:[%s5 + $0x20] sm:$0xff]
  %v143 = vld [vmem:[%s5 + $0x28] sm:$0xff]
  %v144 = vld [vmem:[%s5 + $0x30] sm:$0xff]
  %v145 = vld [vmem:[%s5 + $0x38] sm:$0xff]
  %v146 = vld [vmem:[%s5 + $0x40] sm:$0xff]
  %v147 = vld [vmem:[%s5 + $0x48] sm:$0xff]
  %v148 = vld [vmem:[%s5 + $0x50] sm:$0xff]
  %v149 = vld [vmem:[%s5 + $0x58] sm:$0xff]
  %v150 = vld [vmem:[%s5 + $0x60] sm:$0xff]
  %v151 = vld [vmem:[%s5 + $0x68] sm:$0xff]
  %v152 = vld [vmem:[%s5 + $0x70] sm:$0xff]
  %v153 = vld [vmem:[%s5 + $0x78] sm:$0xff]
  %v154 = vld [vmem:[%s5 + $0x80] sm:$0xff]
  %v155 = vld [vmem:[%s5 + $0x88] sm:$0xff]
  %v156 = vld [vmem:[%s5 + $0x90] sm:$0xff]
  %v157 = vld [vmem:[%s5 + $0x98] sm:$0xff]
  %v158 = vld [vmem:[%s5 + $0xa0] sm:$0xff]
  %v159 = vld [vmem:[%s5 + $0xa8] sm:$0xff]
  %v160 = vld [vmem:[%s5 + $0xb0] sm:$0xff]
  %v161 = vld [vmem:[%s5 + $0xb8] sm:$0xff]
  %v162 = vld [vmem:[%s5 + $0xc0] sm:$0xff]
  %v163 = vld [vmem:[%s5 + $0xc8] sm:$0xff]
  %v164 = vld [vmem:[%s5 + $0xd0] sm:$0xff]
  %v165 = vld [vmem:[%s5 + $0xd8] sm:$0xff]
  %v166 = vld [vmem:[%s5 + $0xe0] sm:$0xff]
  %v167 = vld [vmem:[%s5 + $0xe8] sm:$0xff]
  %v168 = vld [vmem:[%s5 + $0xf0] sm:$0xff]
  %v169 = vld [vmem:[%s5 + $0xf8] sm:$0xff]
  %v170 = vld [vmem:[%s6] sm:$0x3]
  %v172 = vperm.slane %v170, 0
  %v173 = vperm.slane %v170, 1
  %v208 = vunpack.c.l.b16 %v138
  %v209 = vunpack.c.h.b16 %v138
  %v210 = vunpack.c.l.b16 %v139
  %v211 = vunpack.c.h.b16 %v139
  %v212 = vunpack.c.l.b16 %v140
  %v213 = vunpack.c.h.b16 %v140
  %v214 = vunpack.c.l.b16 %v141
  %v215 = vunpack.c.h.b16 %v141
  %v216 = vunpack.c.l.b16 %v142
  %v217 = vunpack.c.h.b16 %v142
  %v218 = vunpack.c.l.b16 %v143
  %v219 = vunpack.c.h.b16 %v143
  %v220 = vunpack.c.l.b16 %v144
  %v221 = vunpack.c.h.b16 %v144
  %v222 = vunpack.c.l.b16 %v145
  %v223 = vunpack.c.h.b16 %v145
  %v224 = vunpack.c.l.b16 %v146
  %v225 = vunpack.c.h.b16 %v146
  %v226 = vunpack.c.l.b16 %v147
  %v227 = vunpack.c.h.b16 %v147
  %v228 = vunpack.c.l.b16 %v148
  %v229 = vunpack.c.h.b16 %v148
  %v230 = vunpack.c.l.b16 %v149
  %v231 = vunpack.c.h.b16 %v149
  %v232 = vunpack.c.l.b16 %v150
  %v233 = vunpack.c.h.b16 %v150
  %v234 = vunpack.c.l.b16 %v151
  %v235 = vunpack.c.h.b16 %v151
  %v236 = vunpack.c.l.b16 %v152
  %v237 = vunpack.c.h.b16 %v152
  %v238 = vunpack.c.l.b16 %v153
  %v239 = vunpack.c.h.b16 %v153
  %v240 = vunpack.c.l.b16 %v154
  %v241 = vunpack.c.h.b16 %v154
  %v242 = vunpack.c.l.b16 %v155
  %v243 = vunpack.c.h.b16 %v155
  %v244 = vunpack.c.l.b16 %v156
  %v245 = vunpack.c.h.b16 %v156
  %v246 = vunpack.c.l.b16 %v157
  %v247 = vunpack.c.h.b16 %v157
  %v248 = vunpack.c.l.b16 %v158
  %v249 = vunpack.c.h.b16 %v158
  %v250 = vunpack.c.l.b16 %v159
  %v251 = vunpack.c.h.b16 %v159
  %v252 = vunpack.c.l.b16 %v160
  %v253 = vunpack.c.h.b16 %v160
  %v254 = vunpack.c.l.b16 %v161
  %v255 = vunpack.c.h.b16 %v161
  %v256 = vunpack.c.l.b16 %v162
  %v257 = vunpack.c.h.b16 %v162
  %v258 = vunpack.c.l.b16 %v163
  %v259 = vunpack.c.h.b16 %v163
  %v260 = vunpack.c.l.b16 %v164
  %v261 = vunpack.c.h.b16 %v164
  %v262 = vunpack.c.l.b16 %v165
  %v263 = vunpack.c.h.b16 %v165
  %v264 = vunpack.c.l.b16 %v166
  %v265 = vunpack.c.h.b16 %v166
  %v266 = vunpack.c.l.b16 %v167
  %v267 = vunpack.c.h.b16 %v167
  %v268 = vunpack.c.l.b16 %v168
  %v269 = vunpack.c.h.b16 %v168
  %v270 = vunpack.c.l.b16 %v169
  %v271 = vunpack.c.h.b16 %v169
  %v272 = vpack.c.b16 %v210, %v208
  %v273 = vpack.c.b16 %v211, %v209
  %v274 = vpack.c.b16 %v214, %v212
  %v275 = vpack.c.b16 %v215, %v213
  %v276 = vpack.c.b16 %v218, %v216
  %v277 = vpack.c.b16 %v219, %v217
  %v278 = vpack.c.b16 %v222, %v220
  %v279 = vpack.c.b16 %v223, %v221
  %v280 = vpack.c.b16 %v226, %v224
  %v281 = vpack.c.b16 %v227, %v225
  %v282 = vpack.c.b16 %v230, %v228
  %v283 = vpack.c.b16 %v231, %v229
  %v284 = vpack.c.b16 %v234, %v232
  %v285 = vpack.c.b16 %v235, %v233
  %v286 = vpack.c.b16 %v238, %v236
  %v287 = vpack.c.b16 %v239, %v237
  %v288 = vpack.c.b16 %v242, %v240
  %v289 = vpack.c.b16 %v243, %v241
  %v290 = vpack.c.b16 %v246, %v244
  %v291 = vpack.c.b16 %v247, %v245
  %v292 = vpack.c.b16 %v250, %v248
  %v293 = vpack.c.b16 %v251, %v249
  %v294 = vpack.c.b16 %v254, %v252
  %v295 = vpack.c.b16 %v255, %v253
  %v296 = vpack.c.b16 %v258, %v256
  %v297 = vpack.c.b16 %v259, %v257
  %v298 = vpack.c.b16 %v262, %v260
  %v299 = vpack.c.b16 %v263, %v261
  %v300 = vpack.c.b16 %v266, %v264
  %v301 = vpack.c.b16 %v267, %v265
  %v302 = vpack.c.b16 %v270, %v268
  %v303 = vpack.c.b16 %v271, %v269
  %336 = vmatpush.bf16.msra.mxu0 %v286
  %337 = vmatpush.bf16.msra.mxu0 %v284
  %338 = vmatpush.bf16.msra.mxu0 %v282
  %339 = vmatpush.bf16.msra.mxu0 %v280
  %340 = vmatpush.bf16.msra.mxu0 %v278
  %341 = vmatpush.bf16.msra.mxu0 %v276
  %342 = vmatpush.bf16.msra.mxu0 %v274
  %343 = vmatpush.bf16.msra.mxu0 %v272
  %344 = vmatmul.bf16.gmra.mxu0 %v136
  %v345 = vpop.f32.mrf.mxu0
  %v346 = vadd.f32 %v172, %v345
  %v347 = vpop.f32.mrf.mxu0
  %348 = vdwg.mxu0
  %349 = vmatpush.bf16.msra.mxu0 %v302
  %350 = vmatpush.bf16.msra.mxu0 %v300
  %351 = vmatpush.bf16.msra.mxu0 %v298
  %352 = vmatpush.bf16.msra.mxu0 %v296
  %353 = vmatpush.bf16.msra.mxu0 %v294
  %354 = vmatpush.bf16.msra.mxu0 %v292
  %355 = vmatpush.bf16.msra.mxu0 %v290
  %356 = vmatpush.bf16.msra.mxu0 %v288
  %357 = vmatmul.bf16.gmra.mxu0 %v137
  %v358 = vpop.f32.mrf.mxu0
  %v359 = vadd.f32 %v346, %v358
  %v360 = vpop.f32.mrf.mxu0
  %361 = vdwg.mxu0
  %362 = vmatpush.bf16.msra.mxu0 %v287
  %363 = vmatpush.bf16.msra.mxu0 %v285
  %364 = vmatpush.bf16.msra.mxu0 %v283
  %365 = vmatpush.bf16.msra.mxu0 %v281
  %366 = vmatpush.bf16.msra.mxu0 %v279
  %367 = vmatpush.bf16.msra.mxu0 %v277
  %368 = vmatpush.bf16.msra.mxu0 %v275
  %369 = vmatpush.bf16.msra.mxu0 %v273
  %370 = vmatmul.bf16.gmra.mxu0 %v136
  %v371 = vpop.f32.mrf.mxu0
  %v372 = vadd.f32 %v173, %v371
  %v373 = vpop.f32.mrf.mxu0
  %374 = vdwg.mxu0
  %375 = vmatpush.bf16.msra.mxu0 %v303
  %376 = vmatpush.bf16.msra.mxu0 %v301
  %377 = vmatpush.bf16.msra.mxu0 %v299
  %378 = vmatpush.bf16.msra.mxu0 %v297
  %379 = vmatpush.bf16.msra.mxu0 %v295
  %380 = vmatpush.bf16.msra.mxu0 %v293
  %381 = vmatpush.bf16.msra.mxu0 %v291
  %382 = vmatpush.bf16.msra.mxu0 %v289
  %383 = vmatmul.bf16.gmra.mxu0 %v137
  %v384 = vpop.f32.mrf.mxu0
  %v385 = vadd.f32 %v372, %v384
  %v386 = vpop.f32.mrf.mxu0
  %387 = vdwg.mxu0
  %v388 = vmax.f32 %v359, 0.0
  %v389 = vmax.f32 %v385, 0.0
  %v390 = vpack.c.bf16 %v388, %v388
  %v391 = vpack.c.bf16 %v389, %v389
  %v392 = vld [vmem:[%s7] sm:$0xff]
  %v393 = vld [vmem:[%s7 + $0x8] sm:$0xff]
  %v394 = vld [vmem:[%s7 + $0x10] sm:$0xff]
  %v395 = vld [vmem:[%s7 + $0x18] sm:$0xff]
  %v396 = vld [vmem:[%s7 + $0x20] sm:$0xff]
  %v397 = vld [vmem:[%s7 + $0x28] sm:$0xff]
  %v398 = vld [vmem:[%s7 + $0x30] sm:$0xff]
  %v399 = vld [vmem:[%s7 + $0x38] sm:$0xff]
  %v400 = vld [vmem:[%s7 + $0x40] sm:$0xff]
  %v401 = vld [vmem:[%s7 + $0x48] sm:$0xff]
  %v402 = vld [vmem:[%s7 + $0x50] sm:$0xff]
  %v403 = vld [vmem:[%s7 + $0x58] sm:$0xff]
  %v404 = vld [vmem:[%s7 + $0x60] sm:$0xff]
  %v405 = vld [vmem:[%s7 + $0x68] sm:$0xff]
  %v406 = vld [vmem:[%s7 + $0x70] sm:$0xff]
  %v407 = vld [vmem:[%s7 + $0x78] sm:$0xff]
  %v408 = vld [vmem:[%s7 + $0x80] sm:$0xff]
  %v409 = vld [vmem:[%s7 + $0x88] sm:$0xff]
  %v410 = vld [vmem:[%s7 + $0x90] sm:$0xff]
  %v411 = vld [vmem:[%s7 + $0x98] sm:$0xff]
  %v412 = vld [vmem:[%s7 + $0xa0] sm:$0xff]
  %v413 = vld [vmem:[%s7 + $0xa8] sm:$0xff]
  %v414 = vld [vmem:[%s7 + $0xb0] sm:$0xff]
  %v415 = vld [vmem:[%s7 + $0xb8] sm:$0xff]
  %v416 = vld [vmem:[%s7 + $0xc0] sm:$0xff]
  %v417 = vld [vmem:[%s7 + $0xc8] sm:$0xff]
  %v418 = vld [vmem:[%s7 + $0xd0] sm:$0xff]
  %v419 = vld [vmem:[%s7 + $0xd8] sm:$0xff]
  %v420 = vld [vmem:[%s7 + $0xe0] sm:$0xff]
  %v421 = vld [vmem:[%s7 + $0xe8] sm:$0xff]
  %v422 = vld [vmem:[%s7 + $0xf0] sm:$0xff]
  %v423 = vld [vmem:[%s7 + $0xf8] sm:$0xff]
  %v424 = vld [vmem:[%s8] sm:$0x3]
  %v426 = vperm.slane %v424, 0
  %v427 = vperm.slane %v424, 1
  %v462 = vunpack.c.l.b16 %v392
  %v463 = vunpack.c.h.b16 %v392
  %v464 = vunpack.c.l.b16 %v393
  %v465 = vunpack.c.h.b16 %v393
  %v466 = vunpack.c.l.b16 %v394
  %v467 = vunpack.c.h.b16 %v394
  %v468 = vunpack.c.l.b16 %v395
  %v469 = vunpack.c.h.b16 %v395
  %v470 = vunpack.c.l.b16 %v396
  %v471 = vunpack.c.h.b16 %v396
  %v472 = vunpack.c.l.b16 %v397
  %v473 = vunpack.c.h.b16 %v397
  %v474 = vunpack.c.l.b16 %v398
  %v475 = vunpack.c.h.b16 %v398
  %v476 = vunpack.c.l.b16 %v399
  %v477 = vunpack.c.h.b16 %v399
  %v478 = vunpack.c.l.b16 %v400
  %v479 = vunpack.c.h.b16 %v400
  %v480 = vunpack.c.l.b16 %v401
  %v481 = vunpack.c.h.b16 %v401
  %v482 = vunpack.c.l.b16 %v402
  %v483 = vunpack.c.h.b16 %v402
  %v484 = vunpack.c.l.b16 %v403
  %v485 = vunpack.c.h.b16 %v403
  %v486 = vunpack.c.l.b16 %v404
  %v487 = vunpack.c.h.b16 %v404
  %v488 = vunpack.c.l.b16 %v405
  %v489 = vunpack.c.h.b16 %v405
  %v490 = vunpack.c.l.b16 %v406
  %v491 = vunpack.c.h.b16 %v406
  %v492 = vunpack.c.l.b16 %v407
  %v493 = vunpack.c.h.b16 %v407
  %v494 = vunpack.c.l.b16 %v408
  %v495 = vunpack.c.h.b16 %v408
  %v496 = vunpack.c.l.b16 %v409
  %v497 = vunpack.c.h.b16 %v409
  %v498 = vunpack.c.l.b16 %v410
  %v499 = vunpack.c.h.b16 %v410
  %v500 = vunpack.c.l.b16 %v411
  %v501 = vunpack.c.h.b16 %v411
  %v502 = vunpack.c.l.b16 %v412
  %v503 = vunpack.c.h.b16 %v412
  %v504 = vunpack.c.l.b16 %v413
  %v505 = vunpack.c.h.b16 %v413
  %v506 = vunpack.c.l.b16 %v414
  %v507 = vunpack.c.h.b16 %v414
  %v508 = vunpack.c.l.b16 %v415
  %v509 = vunpack.c.h.b16 %v415
  %v510 = vunpack.c.l.b16 %v416
  %v511 = vunpack.c.h.b16 %v416
  %v512 = vunpack.c.l.b16 %v417
  %v513 = vunpack.c.h.b16 %v417
  %v514 = vunpack.c.l.b16 %v418
  %v515 = vunpack.c.h.b16 %v418
  %v516 = vunpack.c.l.b16 %v419
  %v517 = vunpack.c.h.b16 %v419
  %v518 = vunpack.c.l.b16 %v420
  %v519 = vunpack.c.h.b16 %v420
  %v520 = vunpack.c.l.b16 %v421
  %v521 = vunpack.c.h.b16 %v421
  %v522 = vunpack.c.l.b16 %v422
  %v523 = vunpack.c.h.b16 %v422
  %v524 = vunpack.c.l.b16 %v423
  %v525 = vunpack.c.h.b16 %v423
  %v526 = vpack.c.b16 %v464, %v462
  %v527 = vpack.c.b16 %v465, %v463
  %v528 = vpack.c.b16 %v468, %v466
  %v529 = vpack.c.b16 %v469, %v467
  %v530 = vpack.c.b16 %v472, %v470
  %v531 = vpack.c.b16 %v473, %v471
  %v532 = vpack.c.b16 %v476, %v474
  %v533 = vpack.c.b16 %v477, %v475
  %v534 = vpack.c.b16 %v480, %v478
  %v535 = vpack.c.b16 %v481, %v479
  %v536 = vpack.c.b16 %v484, %v482
  %v537 = vpack.c.b16 %v485, %v483
  %v538 = vpack.c.b16 %v488, %v486
  %v539 = vpack.c.b16 %v489, %v487
  %v540 = vpack.c.b16 %v492, %v490
  %v541 = vpack.c.b16 %v493, %v491
  %v542 = vpack.c.b16 %v496, %v494
  %v543 = vpack.c.b16 %v497, %v495
  %v544 = vpack.c.b16 %v500, %v498
  %v545 = vpack.c.b16 %v501, %v499
  %v546 = vpack.c.b16 %v504, %v502
  %v547 = vpack.c.b16 %v505, %v503
  %v548 = vpack.c.b16 %v508, %v506
  %v549 = vpack.c.b16 %v509, %v507
  %v550 = vpack.c.b16 %v512, %v510
  %v551 = vpack.c.b16 %v513, %v511
  %v552 = vpack.c.b16 %v516, %v514
  %v553 = vpack.c.b16 %v517, %v515
  %v554 = vpack.c.b16 %v520, %v518
  %v555 = vpack.c.b16 %v521, %v519
  %v556 = vpack.c.b16 %v524, %v522
  %v557 = vpack.c.b16 %v525, %v523
  %590 = vmatpush.bf16.msra.mxu0 %v540
  %591 = vmatpush.bf16.msra.mxu0 %v538
  %592 = vmatpush.bf16.msra.mxu0 %v536
  %593 = vmatpush.bf16.msra.mxu0 %v534
  %594 = vmatpush.bf16.msra.mxu0 %v532
  %595 = vmatpush.bf16.msra.mxu0 %v530
  %596 = vmatpush.bf16.msra.mxu0 %v528
  %597 = vmatpush.bf16.msra.mxu0 %v526
  %598 = vmatmul.bf16.gmra.mxu0 %v390
  %v599 = vpop.f32.mrf.mxu0
  %v600 = vadd.f32 %v426, %v599
  %v601 = vpop.f32.mrf.mxu0
  %602 = vdwg.mxu0
  %603 = vmatpush.bf16.msra.mxu0 %v556
  %604 = vmatpush.bf16.msra.mxu0 %v554
  %605 = vmatpush.bf16.msra.mxu0 %v552
  %606 = vmatpush.bf16.msra.mxu0 %v550
  %607 = vmatpush.bf16.msra.mxu0 %v548
  %608 = vmatpush.bf16.msra.mxu0 %v546
  %609 = vmatpush.bf16.msra.mxu0 %v544
  %610 = vmatpush.bf16.msra.mxu0 %v542
  %611 = vmatmul.bf16.gmra.mxu0 %v391
  %v612 = vpop.f32.mrf.mxu0
  %v613 = vadd.f32 %v600, %v612
  %v614 = vpop.f32.mrf.mxu0
  %615 = vdwg.mxu0
  %616 = vmatpush.bf16.msra.mxu0 %v541
  %617 = vmatpush.bf16.msra.mxu0 %v539
  %618 = vmatpush.bf16.msra.mxu0 %v537
  %619 = vmatpush.bf16.msra.mxu0 %v535
  %620 = vmatpush.bf16.msra.mxu0 %v533
  %621 = vmatpush.bf16.msra.mxu0 %v531
  %622 = vmatpush.bf16.msra.mxu0 %v529
  %623 = vmatpush.bf16.msra.mxu0 %v527
  %624 = vmatmul.bf16.gmra.mxu0 %v390
  %v625 = vpop.f32.mrf.mxu0
  %v626 = vadd.f32 %v427, %v625
  %v627 = vpop.f32.mrf.mxu0
  %628 = vdwg.mxu0
  %629 = vmatpush.bf16.msra.mxu0 %v557
  %630 = vmatpush.bf16.msra.mxu0 %v555
  %631 = vmatpush.bf16.msra.mxu0 %v553
  %632 = vmatpush.bf16.msra.mxu0 %v551
  %633 = vmatpush.bf16.msra.mxu0 %v549
  %634 = vmatpush.bf16.msra.mxu0 %v547
  %635 = vmatpush.bf16.msra.mxu0 %v545
  %636 = vmatpush.bf16.msra.mxu0 %v543
  %637 = vmatmul.bf16.gmra.mxu0 %v391
  %v638 = vpop.f32.mrf.mxu0
  %v639 = vadd.f32 %v626, %v638
  %v640 = vpop.f32.mrf.mxu0
  %641 = vdwg.mxu0
  %v642 = vmax.f32 %v613, 0.0
  %v643 = vmax.f32 %v639, 0.0
  %v644 = vld [vmem:[%s9] sm:$0x3]
  %v646 = vperm.slane %v644, 0
  %v647 = vperm.slane %v644, 1
  %v650 = vmul.f32 %v642, %v646
  %v651 = vmul.f32 %v643, %v647
  %v652 = vadd.f32 %v650, %v651
  %653 = vadd.xlane.f32.xlu0 %v652
  %v654 = vpop.xlane.xlu0 %653
  %v655 = vld [vmem:[#allocation2] sm:$0x1]
  %v657 = vperm.slane %v655, 0
  %v659 = vadd.f32 %v654, %v657
  %vm660 = vcmask 7168
  %661 = vst.msk [vmem:[%s11] sm:$0xff] %vm660, %v659
  // Predicated region
  $region46: #{critic_forward.1} parent=0 // pred_check
    _
  $region47: #{critic_forward.1} parent=0 // pred_check_branch
    %663 = sbr.rel (0) target = $region49
  $region48: #{critic_forward.1} parent=0 // pred_region
    _
  $region49: #{critic_forward.1} parent=0 // pred_fallthru
    _
  // Predicated region
  $region50: #{critic_forward.1} parent=0 // pred_check
    _
  $region51: #{critic_forward.1} parent=0 // pred_check_branch
    %665 = sbr.rel (0) target = $region53
  $region52: #{critic_forward.1} parent=0 // pred_region
    _
  $region53: #{critic_forward.1} parent=0 // pred_fallthru
    _

</llo_original>
